<compile_context>
chip_gen: v7x
topology: tpu7x:2x2x1
jax: 0.10.0
libtpu: 0.0.40
codegen_flags: <defaults>
</compile_context>

<pallas_src>
import functools

import jax
import jax.numpy as jnp
import numpy as np
from jax.experimental import pallas as pl
from jax.experimental.pallas import tpu as pltpu


def _round_up(x, m):
    return (x + m - 1) // m * m


def _mlp_kernel(x_ref, *refs):
    """refs = (w0_ref, w1_ref, ..., w_last_ref, o_ref).

    All matmuls run bf16 x bf16 -> f32 on the MXU. Hidden activations are
    re-packed to bf16 between layers (half vreg/VMEM footprint); ReLU is
    evaluated in f32 (valid on every TPU generation), Sigmoid stays f32 (EUP).
    """
    w_refs = refs[:-1]
    o_ref = refs[-1]
    n_layers = len(w_refs)

    h = x_ref[...].astype(jnp.bfloat16)          # single cast, straight to MXU dtype
    for i, w_ref in enumerate(w_refs):
        acc = jnp.dot(h, w_ref[...], preferred_element_type=jnp.float32)
        if i < n_layers - 1:
            h = jnp.maximum(acc, 0.0).astype(jnp.bfloat16)   # ReLU, bf16-resident
        else:
            h = jax.nn.sigmoid(acc)              # Sigmoid output (f32, EUP slot)
    o_ref[...] = h.astype(o_ref.dtype)


def init_tcnn_mlp_params(key, in_dim, out_dim=3, width=256, depth=8,
                         dtype=jnp.float32):
    """Deterministic synthetic weights, shapes matching tcnn.Network."""
    shapes = ([(in_dim, width)]
              + [(width, width)] * (depth - 2)
              + [(width, out_dim)])
    keys = jax.random.split(key, len(shapes))
    weights = []
    for k, (fan_in, fan_out) in zip(keys, shapes):
        scale = 1.0 / np.sqrt(fan_in)
        weights.append(
            jax.random.uniform(k, (fan_in, fan_out), dtype,
                               minval=-scale, maxval=scale))
    return weights


def tcnn_mlp_regressor_forward(feat, weights, *, tile_n=512):
    """feat: (..., in_dim) channels-last.  Returns (..., out_dim)."""
    orig_shape = feat.shape
    in_dim = orig_shape[-1]
    out_dim = weights[-1].shape[-1]

    x = feat.reshape(-1, in_dim)
    n_rows = x.shape[0]

    # bf16 MXU operands (half the weight DMA / VMEM), f32 accumulation.
    w_bf16 = [w.astype(jnp.bfloat16) for w in weights]

    # Shrink the row tile only for tiny inputs (keep a multiple of 8 sublanes).
    # For large N the ragged tail is a partial last block — no padded HBM copy
    # of the input is ever materialized.
    tile_n = max(8, min(tile_n, _round_up(n_rows, 8)))
    grid = (pl.cdiv(n_rows, tile_n),)

    # Input rows tiled along the grid; weights passed whole with a constant
    # index_map (fetched once) and a single buffer (no dead double-buffer).
    in_specs = [pl.BlockSpec((tile_n, in_dim), lambda i: (i, 0))]
    in_specs += [pl.BlockSpec(w.shape, lambda i: (0, 0),
                              pipeline_mode=pl.Buffered(1)) for w in w_bf16]
    # Narrow output block: out_dim lanes only (masked store), no padding and
    # no post-kernel slice pass.
    out_spec = pl.BlockSpec((tile_n, out_dim), lambda i: (i, 0))

    flops = 2 * n_rows * sum(w.shape[0] * w.shape[1] for w in w_bf16)
    bytes_accessed = (x.size * x.dtype.itemsize
                      + sum(w.size * 2 for w in w_bf16)
                      + n_rows * out_dim * jnp.dtype(feat.dtype).itemsize)
    cost = pl.CostEstimate(flops=flops,
                           transcendentals=n_rows * out_dim,
                           bytes_accessed=bytes_accessed)

    # Real VMEM need: single-buffered weights + double-buffered input/output
    # tiles + activation temporaries.  2x headroom, clamped to [16, 32] MiB so
    # we never request the entire 64 MiB of a v7x TensorCore.
    width_max = max(w.shape[1] for w in w_bf16)
    vmem_est = (sum(w.size * 2 for w in w_bf16)
                + 2 * tile_n * in_dim * x.dtype.itemsize
                + 2 * tile_n * out_dim * jnp.dtype(feat.dtype).itemsize
                + 3 * tile_n * width_max * 4)
    vmem_limit = int(min(32 * 1024 * 1024, max(16 * 1024 * 1024, 2 * vmem_est)))

    out = pl.pallas_call(
        _mlp_kernel,
        out_shape=jax.ShapeDtypeStruct((n_rows, out_dim), feat.dtype),
        grid_spec=pltpu.PrefetchScalarGridSpec(
            num_scalar_prefetch=0,
            grid=grid,
            in_specs=in_specs,
            out_specs=out_spec,
        ),
        compiler_params=pltpu.CompilerParams(
            dimension_semantics=("parallel",),   # row grid shards across TCs (v7x)
            vmem_limit_bytes=vmem_limit),
        cost_estimate=cost,
    )(x, *w_bf16)

    return out.reshape(*orig_shape[:-1], out_dim)


def _reference_forward(feat, weights):
    x = feat.reshape(-1, feat.shape[-1]).astype(jnp.float32)
    h = x
    for i, w in enumerate(weights):
        h = h @ w.astype(jnp.float32)
        if i < len(weights) - 1:
            h = jnp.maximum(h, 0.0)
        else:
            h = jax.nn.sigmoid(h)
    return h.reshape(*feat.shape[:-1], weights[-1].shape[-1]).astype(feat.dtype)


if __name__ == "__main__":
    key = jax.random.PRNGKey(0)
    k_feat, k_feat2, k_w = jax.random.split(key, 3)

    # Small, module-consistent shapes: in_dim=32, width=128, depth=4
    # (=> n_hidden_layers=3), out_dim=3.
    in_dim, out_dim, width, depth = 32, 3, 128, 4
    weights = init_tcnn_mlp_params(k_w, in_dim, out_dim, width, depth)

    # Case 1: evenly-tiled small batch (2, 16, in_dim).
    feat = jax.random.normal(k_feat, (2, 16, in_dim), dtype=jnp.float32)
    fwd = jax.jit(functools.partial(tcnn_mlp_regressor_forward, tile_n=512))
    out = jax.block_until_ready(fwd(feat, weights))
    ref = _reference_forward(feat, weights)
    np.testing.assert_allclose(np.asarray(out), np.asarray(ref),
                               rtol=2e-2, atol=2e-2)
    assert out.shape == (2, 16, out_dim)

    # Case 2: ragged row count (111 rows) — exercises the masked partial last
    # block on both input and narrow output (no input padding copy).
    feat2 = jax.random.normal(k_feat2, (3, 37, in_dim), dtype=jnp.float32)
    fwd2 = jax.jit(functools.partial(tcnn_mlp_regressor_forward, tile_n=512))
    out2 = jax.block_until_ready(fwd2(feat2, weights))
    ref2 = _reference_forward(feat2, weights)
    np.testing.assert_allclose(np.asarray(out2), np.asarray(ref2),
                               rtol=2e-2, atol=2e-2)
    assert out2.shape == (3, 37, out_dim)

    print("KERNEL_OK")
</pallas_src>

<mosaic_0001>
module attributes {stable_mosaic.version = 11 : i64} {
  func.func @_mlp_kernel(%arg0: i32, %arg1: memref<32x32xf32, #tpu.memory_space<vmem>>, %arg2: memref<32x128xbf16, #tpu.memory_space<vmem>>, %arg3: memref<128x128xbf16, #tpu.memory_space<vmem>>, %arg4: memref<128x128xbf16, #tpu.memory_space<vmem>>, %arg5: memref<128x3xbf16, #tpu.memory_space<vmem>>, %arg6: memref<32x3xf32, #tpu.memory_space<vmem>>) attributes {dimension_semantics = [#tpu.dimension_semantics<parallel>], iteration_bounds = array<i64: 1>, scalar_prefetch = 0 : i64, scratch_operands = 0 : i64, tpu.core_type = #tpu.core_type<tc>, window_params = [{transform_indices = @transform_0, window_bounds = array<i64: 32, 32>}, {pipeline_mode = #tpu.pipeline_mode<synchronous>, transform_indices = @transform_1, window_bounds = array<i64: 32, 128>}, {pipeline_mode = #tpu.pipeline_mode<synchronous>, transform_indices = @transform_2, window_bounds = array<i64: 128, 128>}, {pipeline_mode = #tpu.pipeline_mode<synchronous>, transform_indices = @transform_3, window_bounds = array<i64: 128, 128>}, {pipeline_mode = #tpu.pipeline_mode<synchronous>, transform_indices = @transform_4, window_bounds = array<i64: 128, 3>}, {transform_indices = @transform_5, window_bounds = array<i64: 32, 3>}]} {
    %c0 = arith.constant 0 : index
    %c0_0 = arith.constant 0 : index
    %0 = vector.load %arg1[%c0, %c0_0] : memref<32x32xf32, #tpu.memory_space<vmem>>, vector<32x32xf32>
    %1 = arith.truncf %0 : vector<32x32xf32> to vector<32x32xbf16>
    %c0_1 = arith.constant 0 : index
    %c0_2 = arith.constant 0 : index
    %2 = vector.load %arg2[%c0_1, %c0_2] : memref<32x128xbf16, #tpu.memory_space<vmem>>, vector<32x128xbf16>
    %cst = arith.constant dense<0.000000e+00> : vector<32x128xf32>
    %3 = tpu.matmul %1, %2, %cst {dimension_numbers = #tpu.dot_dimension_numbers<[1], [0], [0], [1], [0, 0, 1, 1], [], []>} : vector<32x32xbf16>, vector<32x128xbf16>, vector<32x128xf32> -> vector<32x128xf32>
    %cst_3 = arith.constant 0.000000e+00 : f32
    %4 = vector.broadcast %cst_3 : f32 to vector<32x128xf32>
    %5 = arith.maximumf %3, %4 : vector<32x128xf32>
    %6 = arith.truncf %5 : vector<32x128xf32> to vector<32x128xbf16>
    %c0_4 = arith.constant 0 : index
    %c0_5 = arith.constant 0 : index
    %7 = vector.load %arg3[%c0_4, %c0_5] : memref<128x128xbf16, #tpu.memory_space<vmem>>, vector<128x128xbf16>
    %cst_6 = arith.constant dense<0.000000e+00> : vector<32x128xf32>
    %8 = tpu.matmul %6, %7, %cst_6 {dimension_numbers = #tpu.dot_dimension_numbers<[1], [0], [0], [1], [0, 0, 1, 1], [], []>} : vector<32x128xbf16>, vector<128x128xbf16>, vector<32x128xf32> -> vector<32x128xf32>
    %cst_7 = arith.constant 0.000000e+00 : f32
    %9 = vector.broadcast %cst_7 : f32 to vector<32x128xf32>
    %10 = arith.maximumf %8, %9 : vector<32x128xf32>
    %11 = arith.truncf %10 : vector<32x128xf32> to vector<32x128xbf16>
    %c0_8 = arith.constant 0 : index
    %c0_9 = arith.constant 0 : index
    %12 = vector.load %arg4[%c0_8, %c0_9] : memref<128x128xbf16, #tpu.memory_space<vmem>>, vector<128x128xbf16>
    %cst_10 = arith.constant dense<0.000000e+00> : vector<32x128xf32>
    %13 = tpu.matmul %11, %12, %cst_10 {dimension_numbers = #tpu.dot_dimension_numbers<[1], [0], [0], [1], [0, 0, 1, 1], [], []>} : vector<32x128xbf16>, vector<128x128xbf16>, vector<32x128xf32> -> vector<32x128xf32>
    %cst_11 = arith.constant 0.000000e+00 : f32
    %14 = vector.broadcast %cst_11 : f32 to vector<32x128xf32>
    %15 = arith.maximumf %13, %14 : vector<32x128xf32>
    %16 = arith.truncf %15 : vector<32x128xf32> to vector<32x128xbf16>
    %c0_12 = arith.constant 0 : index
    %c0_13 = arith.constant 0 : index
    %17 = vector.load %arg5[%c0_12, %c0_13] : memref<128x3xbf16, #tpu.memory_space<vmem>>, vector<128x3xbf16>
    %cst_14 = arith.constant dense<0.000000e+00> : vector<32x3xf32>
    %18 = tpu.matmul %16, %17, %cst_14 {dimension_numbers = #tpu.dot_dimension_numbers<[1], [0], [0], [1], [0, 0, 1, 1], [], []>} : vector<32x128xbf16>, vector<128x3xbf16>, vector<32x3xf32> -> vector<32x3xf32>
    %19 = arith.negf %18 : vector<32x3xf32>
    %20 = math.exp %19 : vector<32x3xf32>
    %cst_15 = arith.constant 1.000000e+00 : f32
    %21 = vector.broadcast %cst_15 : f32 to vector<32x3xf32>
    %22 = arith.addf %21, %20 : vector<32x3xf32>
    %23 = arith.divf %21, %22 : vector<32x3xf32>
    %c0_16 = arith.constant 0 : index
    %c0_17 = arith.constant 0 : index
    %24 = vector.load %arg6[%c0_16, %c0_17] : memref<32x3xf32, #tpu.memory_space<vmem>>, vector<32x3xf32>
    tpu.vector_store %arg6[%c0_16, %c0_17], %23 {strides = array<i32>} : memref<32x3xf32, #tpu.memory_space<vmem>>, vector<32x3xf32>,
    return
  }
  func.func @transform_0(%arg0: i32) -> (i32, i32) {
    %c0_i32 = arith.constant 0 : i32
    %c0_i32_0 = arith.constant 0 : i32
    return %arg0, %c0_i32 : i32, i32
  }
  func.func @transform_1(%arg0: i32) -> (i32, i32) {
    %c0_i32 = arith.constant 0 : i32
    %c0_i32_0 = arith.constant 0 : i32
    %c0_i32_1 = arith.constant 0 : i32
    return %c0_i32, %c0_i32_0 : i32, i32
  }
  func.func @transform_2(%arg0: i32) -> (i32, i32) {
    %c0_i32 = arith.constant 0 : i32
    %c0_i32_0 = arith.constant 0 : i32
    %c0_i32_1 = arith.constant 0 : i32
    return %c0_i32, %c0_i32_0 : i32, i32
  }
  func.func @transform_3(%arg0: i32) -> (i32, i32) {
    %c0_i32 = arith.constant 0 : i32
    %c0_i32_0 = arith.constant 0 : i32
    %c0_i32_1 = arith.constant 0 : i32
    return %c0_i32, %c0_i32_0 : i32, i32
  }
  func.func @transform_4(%arg0: i32) -> (i32, i32) {
    %c0_i32 = arith.constant 0 : i32
    %c0_i32_0 = arith.constant 0 : i32
    %c0_i32_1 = arith.constant 0 : i32
    return %c0_i32, %c0_i32_0 : i32, i32
  }
  func.func @transform_5(%arg0: i32) -> (i32, i32) {
    %c0_i32 = arith.constant 0 : i32
    %c0_i32_0 = arith.constant 0 : i32
    return %arg0, %c0_i32 : i32, i32
  }
}

</mosaic_0001>

<llo_original>
// kernel: tcnn_mlp_regressor_forward.1
$region0: #{tcnn_mlp_regressor_forward.1}
  #allocation0 [shape = 'u32[]', space=smem, size = 0x4, offset = 0x4, fixed_abs, tag = 'smem constant byte address 0x4 - core index']
  #allocation1 [shape = 'u32[144,128]{1,0:T(1,128)}', space=vmem, size = 0x12000, scoped, tag = 'internal scratch']
  %s0 = inlined_call_operand.vmem [shape: f32[32,32], index: 0, kind: input, shape index: {}]
  %s1 = inlined_call_operand.vmem [shape: bf16[32,128], index: 1, kind: input, shape index: {}]
  %s2 = inlined_call_operand.vmem [shape: bf16[128,128], index: 2, kind: input, shape index: {}]
  %s3 = inlined_call_operand.vmem [shape: bf16[128,128], index: 3, kind: input, shape index: {}]
  %s4 = inlined_call_operand.vmem [shape: bf16[128,3], index: 4, kind: input, shape index: {}]
  %s5 = inlined_call_operand.vmem [shape: f32[32,3], index: 5, kind: output, shape index: {}]
  %s6 = sld [smem:[#allocation0]]
  $region30: #{tcnn_mlp_regressor_forward.1} parent=0
    _
  %s8 = ssub.s32 1, %s6
  %s9 = scalar_select 0, %s8, %s6
  // Predicated region
  $region2: #{tcnn_mlp_regressor_forward.1} parent=0 // pred_check
    _
  $region3: #{tcnn_mlp_regressor_forward.1} parent=0 // pred_check_branch
    %11 = sbr.rel (0) target = $region5
  $region4: #{tcnn_mlp_regressor_forward.1} parent=0 // pred_region
    _
  $region5: #{tcnn_mlp_regressor_forward.1} parent=0 // pred_fallthru
    _
  // Predicated region
  $region6: #{tcnn_mlp_regressor_forward.1} parent=0 // pred_check
    _
  $region7: #{tcnn_mlp_regressor_forward.1} parent=0 // pred_check_branch
    %13 = sbr.rel (0) target = $region9
  $region8: #{tcnn_mlp_regressor_forward.1} parent=0 // pred_region
    _
  $region9: #{tcnn_mlp_regressor_forward.1} parent=0 // pred_fallthru
    _
  // Predicated region
  $region10: #{tcnn_mlp_regressor_forward.1} parent=0 // pred_check
    _
  $region11: #{tcnn_mlp_regressor_forward.1} parent=0 // pred_check_branch
    %15 = sbr.rel (0) target = $region13
  $region12: #{tcnn_mlp_regressor_forward.1} parent=0 // pred_region
    _
  $region13: #{tcnn_mlp_regressor_forward.1} parent=0 // pred_fallthru
    _
  // Predicated region
  $region14: #{tcnn_mlp_regressor_forward.1} parent=0 // pred_check
    _
  $region15: #{tcnn_mlp_regressor_forward.1} parent=0 // pred_check_branch
    %17 = sbr.rel (0) target = $region17
  $region16: #{tcnn_mlp_regressor_forward.1} parent=0 // pred_region
    _
  $region17: #{tcnn_mlp_regressor_forward.1} parent=0 // pred_fallthru
    _
  // Predicated region
  $region18: #{tcnn_mlp_regressor_forward.1} parent=0 // pred_check
    _
  $region19: #{tcnn_mlp_regressor_forward.1} parent=0 // pred_check_branch
    %19 = sbr.rel (0) target = $region21
  $region20: #{tcnn_mlp_regressor_forward.1} parent=0 // pred_region
    _
  $region21: #{tcnn_mlp_regressor_forward.1} parent=0 // pred_fallthru
    _
  %v21 = vld [vmem:[%s0] sm:$0xff]
  %v22 = vld [vmem:[%s0 + $0x8] sm:$0xff]
  %v23 = vld [vmem:[%s0 + $0x10] sm:$0xff]
  %v24 = vld [vmem:[%s0 + $0x18] sm:$0xff]
  %v25 = vpack.c.bf16 %v22, %v21
  %v26 = vpack.c.bf16 %v24, %v23
  %v27 = vld [vmem:[%s1] sm:$0xf]
  %v28 = vld [vmem:[%s1 + $0x4] sm:$0xf]
  %v29 = vld [vmem:[%s1 + $0x8] sm:$0xf]
  %v30 = vld [vmem:[%s1 + $0xc] sm:$0xf]
  %v35 = vunpack.c.l.b16 %v27
  %v36 = vunpack.c.l.b16 %v28
  %v37 = vunpack.c.l.b16 %v29
  %v38 = vunpack.c.l.b16 %v30
  %v39 = vpack.c.b16 %v36, %v35
  %v40 = vpack.c.b16 %v38, %v37
  %vm43 = vcmask 261120
  %v45 = vsel %vm43, %v25, 0
  %v48 = vsel %vm43, %v26, 0
  %50 = vmatprep.subr.bf16.mxu0 0
  %51 = vmatpush1.bf16.msra.mxu0 %v39
  %52 = vmatprep.subr.bf16.mxu0 0
  %53 = vmatpush1.bf16.msra.mxu0 %v40
  %54 = vmatprep.subr.bf16.mxu0 0
  %55 = vmatpush1.bf16.msra.mxu0 0
  %56 = vmatprep.subr.bf16.mxu0 0
  %57 = vmatpush1.bf16.msra.mxu0 0
  %58 = vmatprep.subr.bf16.mxu0 0
  %59 = vmatpush1.bf16.msra.mxu0 0
  %60 = vmatprep.subr.bf16.mxu0 0
  %61 = vmatpush1.bf16.msra.mxu0 0
  %62 = vmatprep.subr.bf16.mxu0 0
  %63 = vmatpush1.bf16.msra.mxu0 0
  %64 = vmatprep.subr.bf16.mxu0 0
  %65 = vmatpush1.bf16.msra.mxu0 0
  %66 = vmatprep.subr.bf16.mxu0 0
  %67 = vmatpush1.bf16.msra.mxu0 0
  %68 = vmatprep.subr.bf16.mxu0 0
  %69 = vmatpush1.bf16.msra.mxu0 0
  %70 = vmatprep.subr.bf16.mxu0 0
  %71 = vmatpush1.bf16.msra.mxu0 0
  %72 = vmatprep.subr.bf16.mxu0 0
  %73 = vmatpush1.bf16.msra.mxu0 0
  %74 = vmatprep.subr.bf16.mxu0 0
  %75 = vmatpush1.bf16.msra.mxu0 0
  %76 = vmatprep.subr.bf16.mxu0 0
  %77 = vmatpush1.bf16.msra.mxu0 0
  %78 = vmatprep.subr.bf16.mxu0 0
  %79 = vmatpush1.bf16.msra.mxu0 0
  %80 = vmatprep.subr.bf16.mxu0 0
  %81 = vmatpush1.bf16.msra.mxu0 0
  %82 = vmatprep.mubr.bf16.mxu0 0
  %83 = vmatmul.mubr.bf16.gmra.mrb[0].mxu0 %v45
  %v84 = vpop.f32.mrb[0].mxu0
  %v85 = vadd.f32 0.0, %v84
  %v86 = vpop.f32.mrb[0].mxu0
  %v87 = vpop.f32.mrb[0].mxu0
  %v88 = vadd.f32 0.0, %v87
  %v89 = vpop.f32.mrb[0].mxu0
  %90 = vmatprep.mubr.bf16.mxu0 0
  %91 = vmatmul.mubr.bf16.gmra.mrb[0].mxu0 %v48
  %v92 = vpop.f32.mrb[0].mxu0
  %v93 = vadd.f32 0.0, %v92
  %v94 = vpop.f32.mrb[0].mxu0
  %v95 = vpop.f32.mrb[0].mxu0
  %v96 = vadd.f32 0.0, %v95
  %v97 = vpop.f32.mrb[0].mxu0
  %98 = vdwg.mxu0
  %v99 = vmax.f32 %v85, 0.0
  %v100 = vmax.f32 %v88, 0.0
  %v101 = vmax.f32 %v93, 0.0
  %v102 = vmax.f32 %v96, 0.0
  %v103 = vpack.c.bf16 %v100, %v99
  %v104 = vpack.c.bf16 %v102, %v101
  %v105 = vld [vmem:[%s2] sm:$0xf]
  %v106 = vld [vmem:[%s2 + $0x4] sm:$0xf]
  %v107 = vld [vmem:[%s2 + $0x8] sm:$0xf]
  %v108 = vld [vmem:[%s2 + $0xc] sm:$0xf]
  %v109 = vld [vmem:[%s2 + $0x10] sm:$0xf]
  %v110 = vld [vmem:[%s2 + $0x14] sm:$0xf]
  %v111 = vld [vmem:[%s2 + $0x18] sm:$0xf]
  %v112 = vld [vmem:[%s2 + $0x1c] sm:$0xf]
  %v113 = vld [vmem:[%s2 + $0x20] sm:$0xf]
  %v114 = vld [vmem:[%s2 + $0x24] sm:$0xf]
  %v115 = vld [vmem:[%s2 + $0x28] sm:$0xf]
  %v116 = vld [vmem:[%s2 + $0x2c] sm:$0xf]
  %v117 = vld [vmem:[%s2 + $0x30] sm:$0xf]
  %v118 = vld [vmem:[%s2 + $0x34] sm:$0xf]
  %v119 = vld [vmem:[%s2 + $0x38] sm:$0xf]
  %v120 = vld [vmem:[%s2 + $0x3c] sm:$0xf]
  %v137 = vunpack.c.l.b16 %v105
  %v138 = vunpack.c.l.b16 %v106
  %v139 = vunpack.c.l.b16 %v107
  %v140 = vunpack.c.l.b16 %v108
  %v141 = vunpack.c.l.b16 %v109
  %v142 = vunpack.c.l.b16 %v110
  %v143 = vunpack.c.l.b16 %v111
  %v144 = vunpack.c.l.b16 %v112
  %v145 = vunpack.c.l.b16 %v113
  %v146 = vunpack.c.l.b16 %v114
  %v147 = vunpack.c.l.b16 %v115
  %v148 = vunpack.c.l.b16 %v116
  %v149 = vunpack.c.l.b16 %v117
  %v150 = vunpack.c.l.b16 %v118
  %v151 = vunpack.c.l.b16 %v119
  %v152 = vunpack.c.l.b16 %v120
  %v153 = vpack.c.b16 %v138, %v137
  %v154 = vpack.c.b16 %v140, %v139
  %v155 = vpack.c.b16 %v142, %v141
  %v156 = vpack.c.b16 %v144, %v143
  %v157 = vpack.c.b16 %v146, %v145
  %v158 = vpack.c.b16 %v148, %v147
  %v159 = vpack.c.b16 %v150, %v149
  %v160 = vpack.c.b16 %v152, %v151
  %169 = vmatprep.subr.bf16.mxu0 0
  %170 = vmatpush1.bf16.msra.mxu0 %v153
  %171 = vmatprep.subr.bf16.mxu0 0
  %172 = vmatpush1.bf16.msra.mxu0 %v154
  %173 = vmatprep.subr.bf16.mxu0 0
  %174 = vmatpush1.bf16.msra.mxu0 %v155
  %175 = vmatprep.subr.bf16.mxu0 0
  %176 = vmatpush1.bf16.msra.mxu0 %v156
  %177 = vmatprep.subr.bf16.mxu0 0
  %178 = vmatpush1.bf16.msra.mxu0 %v157
  %179 = vmatprep.subr.bf16.mxu0 0
  %180 = vmatpush1.bf16.msra.mxu0 %v158
  %181 = vmatprep.subr.bf16.mxu0 0
  %182 = vmatpush1.bf16.msra.mxu0 %v159
  %183 = vmatprep.subr.bf16.mxu0 0
  %184 = vmatpush1.bf16.msra.mxu0 %v160
  %185 = vmatprep.subr.bf16.mxu0 0
  %186 = vmatpush1.bf16.msra.mxu0 0
  %187 = vmatprep.subr.bf16.mxu0 0
  %188 = vmatpush1.bf16.msra.mxu0 0
  %189 = vmatprep.subr.bf16.mxu0 0
  %190 = vmatpush1.bf16.msra.mxu0 0
  %191 = vmatprep.subr.bf16.mxu0 0
  %192 = vmatpush1.bf16.msra.mxu0 0
  %193 = vmatprep.subr.bf16.mxu0 0
  %194 = vmatpush1.bf16.msra.mxu0 0
  %195 = vmatprep.subr.bf16.mxu0 0
  %196 = vmatpush1.bf16.msra.mxu0 0
  %197 = vmatprep.subr.bf16.mxu0 0
  %198 = vmatpush1.bf16.msra.mxu0 0
  %199 = vmatprep.subr.bf16.mxu0 0
  %200 = vmatpush1.bf16.msra.mxu0 0
  %201 = vmatprep.mubr.bf16.mxu0 0
  %202 = vmatmul.mubr.bf16.gmra.mrb[0].mxu0 %v103
  %v203 = vpop.f32.mrb[0].mxu0
  %v204 = vadd.f32 0.0, %v203
  %v205 = vpop.f32.mrb[0].mxu0
  %v206 = vpop.f32.mrb[0].mxu0
  %v207 = vadd.f32 0.0, %v206
  %v208 = vpop.f32.mrb[0].mxu0
  %209 = vmatprep.mubr.bf16.mxu0 0
  %210 = vmatmul.mubr.bf16.gmra.mrb[0].mxu0 %v104
  %v211 = vpop.f32.mrb[0].mxu0
  %v212 = vadd.f32 0.0, %v211
  %v213 = vpop.f32.mrb[0].mxu0
  %v214 = vpop.f32.mrb[0].mxu0
  %v215 = vadd.f32 0.0, %v214
  %v216 = vpop.f32.mrb[0].mxu0
  %217 = vdwg.mxu0
  %v218 = vmax.f32 %v204, 0.0
  %v219 = vmax.f32 %v207, 0.0
  %v220 = vmax.f32 %v212, 0.0
  %v221 = vmax.f32 %v215, 0.0
  %v222 = vpack.c.bf16 %v219, %v218
  %v223 = vpack.c.bf16 %v221, %v220
  %v224 = vld [vmem:[%s3] sm:$0xf]
  %v225 = vld [vmem:[%s3 + $0x4] sm:$0xf]
  %v226 = vld [vmem:[%s3 + $0x8] sm:$0xf]
  %v227 = vld [vmem:[%s3 + $0xc] sm:$0xf]
  %v228 = vld [vmem:[%s3 + $0x10] sm:$0xf]
  %v229 = vld [vmem:[%s3 + $0x14] sm:$0xf]
  %v230 = vld [vmem:[%s3 + $0x18] sm:$0xf]
  %v231 = vld [vmem:[%s3 + $0x1c] sm:$0xf]
  %v232 = vld [vmem:[%s3 + $0x20] sm:$0xf]
  %v233 = vld [vmem:[%s3 + $0x24] sm:$0xf]
  %v234 = vld [vmem:[%s3 + $0x28] sm:$0xf]
  %v235 = vld [vmem:[%s3 + $0x2c] sm:$0xf]
  %v236 = vld [vmem:[%s3 + $0x30] sm:$0xf]
  %v237 = vld [vmem:[%s3 + $0x34] sm:$0xf]
  %v238 = vld [vmem:[%s3 + $0x38] sm:$0xf]
  %v239 = vld [vmem:[%s3 + $0x3c] sm:$0xf]
  %v256 = vunpack.c.l.b16 %v224
  %v257 = vunpack.c.l.b16 %v225
  %v258 = vunpack.c.l.b16 %v226
  %v259 = vunpack.c.l.b16 %v227
  %v260 = vunpack.c.l.b16 %v228
  %v261 = vunpack.c.l.b16 %v229
  %v262 = vunpack.c.l.b16 %v230
  %v263 = vunpack.c.l.b16 %v231
  %v264 = vunpack.c.l.b16 %v232
  %v265 = vunpack.c.l.b16 %v233
  %v266 = vunpack.c.l.b16 %v234
  %v267 = vunpack.c.l.b16 %v235
  %v268 = vunpack.c.l.b16 %v236
  %v269 = vunpack.c.l.b16 %v237
  %v270 = vunpack.c.l.b16 %v238
  %v271 = vunpack.c.l.b16 %v239
  %v272 = vpack.c.b16 %v257, %v256
  %v273 = vpack.c.b16 %v259, %v258
  %v274 = vpack.c.b16 %v261, %v260
  %v275 = vpack.c.b16 %v263, %v262
  %v276 = vpack.c.b16 %v265, %v264
  %v277 = vpack.c.b16 %v267, %v266
  %v278 = vpack.c.b16 %v269, %v268
  %v279 = vpack.c.b16 %v271, %v270
  %288 = vmatprep.subr.bf16.mxu0 0
  %289 = vmatpush1.bf16.msra.mxu0 %v272
  %290 = vmatprep.subr.bf16.mxu0 0
  %291 = vmatpush1.bf16.msra.mxu0 %v273
  %292 = vmatprep.subr.bf16.mxu0 0
  %293 = vmatpush1.bf16.msra.mxu0 %v274
  %294 = vmatprep.subr.bf16.mxu0 0
  %295 = vmatpush1.bf16.msra.mxu0 %v275
  %296 = vmatprep.subr.bf16.mxu0 0
  %297 = vmatpush1.bf16.msra.mxu0 %v276
  %298 = vmatprep.subr.bf16.mxu0 0
  %299 = vmatpush1.bf16.msra.mxu0 %v277
  %300 = vmatprep.subr.bf16.mxu0 0
  %301 = vmatpush1.bf16.msra.mxu0 %v278
  %302 = vmatprep.subr.bf16.mxu0 0
  %303 = vmatpush1.bf16.msra.mxu0 %v279
  %304 = vmatprep.subr.bf16.mxu0 0
  %305 = vmatpush1.bf16.msra.mxu0 0
  %306 = vmatprep.subr.bf16.mxu0 0
  %307 = vmatpush1.bf16.msra.mxu0 0
  %308 = vmatprep.subr.bf16.mxu0 0
  %309 = vmatpush1.bf16.msra.mxu0 0
  %310 = vmatprep.subr.bf16.mxu0 0
  %311 = vmatpush1.bf16.msra.mxu0 0
  %312 = vmatprep.subr.bf16.mxu0 0
  %313 = vmatpush1.bf16.msra.mxu0 0
  %314 = vmatprep.subr.bf16.mxu0 0
  %315 = vmatpush1.bf16.msra.mxu0 0
  %316 = vmatprep.subr.bf16.mxu0 0
  %317 = vmatpush1.bf16.msra.mxu0 0
  %318 = vmatprep.subr.bf16.mxu0 0
  %319 = vmatpush1.bf16.msra.mxu0 0
  %320 = vmatprep.mubr.bf16.mxu0 0
  %321 = vmatmul.mubr.bf16.gmra.mrb[0].mxu0 %v222
  %v322 = vpop.f32.mrb[0].mxu0
  %v323 = vadd.f32 0.0, %v322
  %v324 = vpop.f32.mrb[0].mxu0
  %v325 = vpop.f32.mrb[0].mxu0
  %v326 = vadd.f32 0.0, %v325
  %v327 = vpop.f32.mrb[0].mxu0
  %328 = vmatprep.mubr.bf16.mxu0 0
  %329 = vmatmul.mubr.bf16.gmra.mrb[0].mxu0 %v223
  %v330 = vpop.f32.mrb[0].mxu0
  %v331 = vadd.f32 0.0, %v330
  %v332 = vpop.f32.mrb[0].mxu0
  %v333 = vpop.f32.mrb[0].mxu0
  %v334 = vadd.f32 0.0, %v333
  %v335 = vpop.f32.mrb[0].mxu0
  %336 = vdwg.mxu0
  %v337 = vmax.f32 %v323, 0.0
  %v338 = vmax.f32 %v326, 0.0
  %v339 = vmax.f32 %v331, 0.0
  %v340 = vmax.f32 %v334, 0.0
  %v341 = vpack.c.bf16 %v338, %v337
  %v342 = vpack.c.bf16 %v340, %v339
  %v343 = vld [vmem:[%s4] sm:$0xf]
  %v344 = vld [vmem:[%s4 + $0x4] sm:$0xf]
  %v345 = vld [vmem:[%s4 + $0x8] sm:$0xf]
  %v346 = vld [vmem:[%s4 + $0xc] sm:$0xf]
  %v347 = vld [vmem:[%s4 + $0x10] sm:$0xf]
  %v348 = vld [vmem:[%s4 + $0x14] sm:$0xf]
  %v349 = vld [vmem:[%s4 + $0x18] sm:$0xf]
  %v350 = vld [vmem:[%s4 + $0x1c] sm:$0xf]
  %v351 = vld [vmem:[%s4 + $0x20] sm:$0xf]
  %v352 = vld [vmem:[%s4 + $0x24] sm:$0xf]
  %v353 = vld [vmem:[%s4 + $0x28] sm:$0xf]
  %v354 = vld [vmem:[%s4 + $0x2c] sm:$0xf]
  %v355 = vld [vmem:[%s4 + $0x30] sm:$0xf]
  %v356 = vld [vmem:[%s4 + $0x34] sm:$0xf]
  %v357 = vld [vmem:[%s4 + $0x38] sm:$0xf]
  %v358 = vld [vmem:[%s4 + $0x3c] sm:$0xf]
  %v375 = vunpack.c.l.b16 %v343
  %v376 = vunpack.c.l.b16 %v344
  %v377 = vunpack.c.l.b16 %v345
  %v378 = vunpack.c.l.b16 %v346
  %v379 = vunpack.c.l.b16 %v347
  %v380 = vunpack.c.l.b16 %v348
  %v381 = vunpack.c.l.b16 %v349
  %v382 = vunpack.c.l.b16 %v350
  %v383 = vunpack.c.l.b16 %v351
  %v384 = vunpack.c.l.b16 %v352
  %v385 = vunpack.c.l.b16 %v353
  %v386 = vunpack.c.l.b16 %v354
  %v387 = vunpack.c.l.b16 %v355
  %v388 = vunpack.c.l.b16 %v356
  %v389 = vunpack.c.l.b16 %v357
  %v390 = vunpack.c.l.b16 %v358
  %v391 = vpack.c.b16 %v376, %v375
  %v392 = vpack.c.b16 %v378, %v377
  %v393 = vpack.c.b16 %v380, %v379
  %v394 = vpack.c.b16 %v382, %v381
  %v395 = vpack.c.b16 %v384, %v383
  %v396 = vpack.c.b16 %v386, %v385
  %v397 = vpack.c.b16 %v388, %v387
  %v398 = vpack.c.b16 %v390, %v389
  %407 = vmatprep.subr.bf16.mxu0 0
  %408 = vmatpush1.bf16.msra.mxu0 %v391
  %409 = vmatprep.subr.bf16.mxu0 0
  %410 = vmatpush1.bf16.msra.mxu0 %v392
  %411 = vmatprep.subr.bf16.mxu0 0
  %412 = vmatpush1.bf16.msra.mxu0 %v393
  %413 = vmatprep.subr.bf16.mxu0 0
  %414 = vmatpush1.bf16.msra.mxu0 %v394
  %415 = vmatprep.subr.bf16.mxu0 0
  %416 = vmatpush1.bf16.msra.mxu0 %v395
  %417 = vmatprep.subr.bf16.mxu0 0
  %418 = vmatpush1.bf16.msra.mxu0 %v396
  %419 = vmatprep.subr.bf16.mxu0 0
  %420 = vmatpush1.bf16.msra.mxu0 %v397
  %421 = vmatprep.subr.bf16.mxu0 0
  %422 = vmatpush1.bf16.msra.mxu0 %v398
  %423 = vmatprep.subr.bf16.mxu0 0
  %424 = vmatpush1.bf16.msra.mxu0 0
  %425 = vmatprep.subr.bf16.mxu0 0
  %426 = vmatpush1.bf16.msra.mxu0 0
  %427 = vmatprep.subr.bf16.mxu0 0
  %428 = vmatpush1.bf16.msra.mxu0 0
  %429 = vmatprep.subr.bf16.mxu0 0
  %430 = vmatpush1.bf16.msra.mxu0 0
  %431 = vmatprep.subr.bf16.mxu0 0
  %432 = vmatpush1.bf16.msra.mxu0 0
  %433 = vmatprep.subr.bf16.mxu0 0
  %434 = vmatpush1.bf16.msra.mxu0 0
  %435 = vmatprep.subr.bf16.mxu0 0
  %436 = vmatpush1.bf16.msra.mxu0 0
  %437 = vmatprep.subr.bf16.mxu0 0
  %438 = vmatpush1.bf16.msra.mxu0 0
  %439 = vmatprep.mubr.bf16.mxu0 0
  %440 = vmatmul.mubr.bf16.gmra.mrb[0].mxu0 %v341
  %v441 = vpop.f32.mrb[0].mxu0
  %v442 = vadd.f32 0.0, %v441
  %v443 = vpop.f32.mrb[0].mxu0
  %v444 = vpop.f32.mrb[0].mxu0
  %v445 = vadd.f32 0.0, %v444
  %v446 = vpop.f32.mrb[0].mxu0
  %447 = vmatprep.mubr.bf16.mxu0 0
  %448 = vmatmul.mubr.bf16.gmra.mrb[0].mxu0 %v342
  %v449 = vpop.f32.mrb[0].mxu0
  %v450 = vadd.f32 0.0, %v449
  %v451 = vpop.f32.mrb[0].mxu0
  %v452 = vpop.f32.mrb[0].mxu0
  %v453 = vadd.f32 0.0, %v452
  %v454 = vpop.f32.mrb[0].mxu0
  %455 = vdwg.mxu0
  %v456 = vxor.u32 %v442, 2147483648
  %v457 = vxor.u32 %v445, 2147483648
  %v458 = vxor.u32 %v450, 2147483648
  %v459 = vxor.u32 %v453, 2147483648
  %v460 = vmul.f32 %v456, 1.442695
  %v461 = vpow.pop %v460
  %v462 = vmul.f32 %v457, 1.442695
  %v463 = vpow.pop %v462
  %v464 = vmul.f32 %v458, 1.442695
  %v465 = vpow.pop %v464
  %v466 = vmul.f32 %v459, 1.442695
  %v467 = vpow.pop %v466
  %v468 = vadd.f32 %v461, 1.0
  %v469 = vadd.f32 %v463, 1.0
  %v470 = vadd.f32 %v465, 1.0
  %v471 = vadd.f32 %v467, 1.0
  %v472 = vrcp.pop %v468
  %v473 = vmul.f32 1.0, %v472
  %v474 = vrcp.pop %v469
  %v475 = vmul.f32 1.0, %v474
  %v476 = vrcp.pop %v470
  %v477 = vmul.f32 1.0, %v476
  %v478 = vrcp.pop %v471
  %v479 = vmul.f32 1.0, %v478
  %vm480 = vcmask 23552
  %481 = vst.msk [vmem:[%s5] sm:$0xff] %vm480, %v473
  %482 = vst.msk [vmem:[%s5 + $0x8] sm:$0xff] %vm480, %v475
  %483 = vst.msk [vmem:[%s5 + $0x10] sm:$0xff] %vm480, %v477
  %484 = vst.msk [vmem:[%s5 + $0x18] sm:$0xff] %vm480, %v479
  // Predicated region
  $region22: #{tcnn_mlp_regressor_forward.1} parent=0 // pred_check
    _
  $region23: #{tcnn_mlp_regressor_forward.1} parent=0 // pred_check_branch
    %486 = sbr.rel (0) target = $region25
  $region24: #{tcnn_mlp_regressor_forward.1} parent=0 // pred_region
    _
  $region25: #{tcnn_mlp_regressor_forward.1} parent=0 // pred_fallthru
    _
  // Predicated region
  $region26: #{tcnn_mlp_regressor_forward.1} parent=0 // pred_check
    _
  $region27: #{tcnn_mlp_regressor_forward.1} parent=0 // pred_check_branch
    %488 = sbr.rel (0) target = $region29
  $region28: #{tcnn_mlp_regressor_forward.1} parent=0 // pred_region
    _
  $region29: #{tcnn_mlp_regressor_forward.1} parent=0 // pred_fallthru
    _

</llo_original>
